<compile_context>
chip_gen: v6e
topology: v6e:2x2x1
jax: 0.10.0
libtpu: 0.0.40
codegen_flags: <defaults>
</compile_context>

<pallas_src>
import functools

import jax
import jax.numpy as jnp
from jax.experimental import pallas as pl
from jax.experimental.pallas import tpu as pltpu


def upconv_relu_kernel(x_ref, w_ref, b_ref, o_ref, *, width):
    """One batch element: fused 3x3 ConvTranspose2d(s=1, p=1) + bias + ReLU.

    x_ref: (Cin,  H*W)   channels on sublanes, flattened spatial on lanes
    w_ref: (Cout, 9*Cin) fused correlation weights, [co, (ky*3 + kx)*Cin + ci]
    b_ref: (Cout, 1)
    o_ref: (Cout, H*W)
    """
    cin, hw = x_ref.shape
    w = width
    pad = w + 1                        # covers the largest tap shift |dy*W + dx|

    x = x_ref[...].astype(jnp.float32)

    # Column index of every flattened spatial position (TPU iota must be >=2D).
    col = jax.lax.broadcasted_iota(jnp.int32, (1, hw), 1) % w

    # Horizontal-wrap masking: a dx=-1 tap would wrap to column W-1 of the row
    # above, a dx=+1 tap to column 0 of the row below. Zero those columns in
    # the *source* once and reuse the masked copy for all three dy values.
    x_dx_m1 = jnp.where(col == (w - 1), 0.0, x)    # source for dx = -1 taps
    x_dx_p1 = jnp.where(col == 0, 0.0, x)          # source for dx = +1 taps

    # In-register zero border handles the vertical (dy) out-of-image taps.
    # Fold each variant's dx into its left/right pad widths so that all three
    # dy tap-groups below share the SAME slice start (3 slices, not 9).
    def padded(v, dx):
        left = jnp.zeros((cin, pad - dx), jnp.float32)
        right = jnp.zeros((cin, pad + dx), jnp.float32)
        return jnp.concatenate([left, v, right], axis=1)

    # (3*Cin, H*W + 2*pad); sublane blocks ordered dx = -1, 0, +1.
    stacked = jnp.concatenate(
        [padded(x_dx_m1, -1), padded(x, 0), padded(x_dx_p1, +1)], axis=0)

    # im2col in registers: one lane-shifted view per dy, stacked on sublanes.
    groups = []
    for dy in (-1, 0, 1):
        start = pad + dy * w                        # static Python int
        groups.append(stacked[:, start:start + hw])
    patches = jnp.concatenate(groups, axis=0)       # (9*Cin, H*W)

    # Single deep matmul on the MXU (K = 9*Cin instead of 9 matmuls of K=Cin).
    acc = jnp.dot(w_ref[...], patches, preferred_element_type=jnp.float32)
    acc = jnp.maximum(acc + b_ref[...], 0.0)        # bias + ReLU (F.relu)
    o_ref[...] = acc.astype(o_ref.dtype)


def upconv_block(x_nchw, weight, bias):
    """ConvTranspose2d(Cin, Cout, k=3, s=1, p=1) + ReLU.

    x_nchw: (B, Cin, H, W); weight: (Cin, Cout, 3, 3) (PyTorch layout);
    bias: (Cout,). Returns (B, Cout, H, W) in the PyTorch NCHW convention.
    """
    B, Cin, H, W = x_nchw.shape
    Cout = weight.shape[1]
    HW = H * W

    # Metadata-only reshape: spatial goes onto the lane axis, layout unchanged.
    x_flat = x_nchw.reshape(B, Cin, HW)

    # ConvTranspose2d(k=3, s=1, p=1) == same-padded correlation with spatially
    # flipped taps and (Cin, Cout) swapped. Fuse the 9 taps into one
    # lane-dense (Cout, 9*Cin) matrix ordered [co, (ky*3 + kx)*Cin + ci].
    w_corr = weight[:, :, ::-1, ::-1]                            # (Cin,Cout,3,3)
    w_fused = jnp.transpose(w_corr, (1, 2, 3, 0)).reshape(Cout, 9 * Cin)
    b2 = bias.reshape(Cout, 1)

    kernel = functools.partial(upconv_relu_kernel, width=W)

    cost = pl.CostEstimate(
        flops=2 * B * HW * 9 * Cin * Cout,
        transcendentals=0,
        bytes_accessed=4 * (B * Cin * HW + Cout * 9 * Cin + Cout
                            + B * Cout * HW),
    )

    out_flat = pl.pallas_call(
        kernel,
        out_shape=jax.ShapeDtypeStruct((B, Cout, HW), x_nchw.dtype),
        grid_spec=pltpu.PrefetchScalarGridSpec(
            num_scalar_prefetch=0,
            grid=(B,),
            in_specs=[
                pl.BlockSpec((None, Cin, HW), lambda b: (b, 0, 0)),
                pl.BlockSpec((Cout, 9 * Cin), lambda b: (0, 0)),   # VMEM-resident
                pl.BlockSpec((Cout, 1), lambda b: (0, 0)),         # VMEM-resident
            ],
            out_specs=pl.BlockSpec((None, Cout, HW), lambda b: (b, 0, 0)),
        ),
        compiler_params=pltpu.CompilerParams(
            dimension_semantics=("parallel",),
            # Explicit scoped-VMEM budget; raise with tile size if row tiling
            # is added for large images.
            vmem_limit_bytes=32 * 1024 * 1024,
        ),
        cost_estimate=cost,
    )(x_flat, w_fused, b2)

    # Metadata-only reshape back to (B, Cout, H, W).
    return out_flat.reshape(B, Cout, H, W)


def ref_upconv_relu(x, weight, bias):
    """Pure-JAX reference implementing ConvTranspose2d's scatter definition."""
    B, Cin, H, W = x.shape
    Cout = weight.shape[1]
    out_full = jnp.zeros((B, Cout, H + 2, W + 2), dtype=jnp.float32)
    for ky in range(3):
        for kx in range(3):
            contrib = jnp.einsum('nchw,co->nohw', x, weight[:, :, ky, kx])
            out_full = out_full.at[:, :, ky:ky + H, kx:kx + W].add(contrib)
    out = out_full[:, :, 1:1 + H, 1:1 + W] + bias[None, :, None, None]
    return jnp.maximum(out, 0.0)


if __name__ == "__main__":
    B, Cin, Cout, H, W = 2, 4, 8, 16, 16

    key = jax.random.PRNGKey(0)
    k1, k2, k3 = jax.random.split(key, 3)
    x = jax.random.normal(k1, (B, Cin, H, W), dtype=jnp.float32)
    # Deterministic synthetic params; shapes match nn.ConvTranspose2d(Cin, Cout, 3):
    #   weight: (in_channels, out_channels, kH, kW), bias: (out_channels,)
    bound = 1.0 / ((Cin * 3 * 3) ** 0.5)
    weight = jax.random.uniform(k2, (Cin, Cout, 3, 3), dtype=jnp.float32,
                                minval=-bound, maxval=bound)
    bias = jax.random.uniform(k3, (Cout,), dtype=jnp.float32,
                              minval=-bound, maxval=bound)

    out = jax.block_until_ready(upconv_block(x, weight, bias))
    ref = ref_upconv_relu(x, weight, bias)

    assert out.shape == (B, Cout, H, W), out.shape
    assert jnp.allclose(out, ref, atol=1e-5, rtol=1e-5), float(
        jnp.max(jnp.abs(out - ref)))
    print("KERNEL_OK")
</pallas_src>

<mosaic_0001>
module attributes {stable_mosaic.version = 11 : i64} {
  func.func @upconv_relu_kernel(%arg0: i32, %arg1: memref<1x4x256xf32, #tpu.memory_space<vmem>>, %arg2: memref<8x36xf32, #tpu.memory_space<vmem>>, %arg3: memref<8x1xf32, #tpu.memory_space<vmem>>, %arg4: memref<1x8x256xf32, #tpu.memory_space<vmem>>) attributes {dimension_semantics = [#tpu.dimension_semantics<parallel>], iteration_bounds = array<i64: 2>, scalar_prefetch = 0 : i64, scratch_operands = 0 : i64, tpu.core_type = #tpu.core_type<tc>, window_params = [{transform_indices = @transform_0, window_bounds = array<i64: 1, 4, 256>}, {pipeline_mode = #tpu.pipeline_mode<synchronous>, transform_indices = @transform_1, window_bounds = array<i64: 8, 36>}, {pipeline_mode = #tpu.pipeline_mode<synchronous>, transform_indices = @transform_2, window_bounds = array<i64: 8, 1>}, {transform_indices = @transform_3, window_bounds = array<i64: 1, 8, 256>}]} {
    %c0 = arith.constant 0 : index
    %c0_0 = arith.constant 0 : index
    %c0_1 = arith.constant 0 : index
    %0 = vector.load %arg1[%c0, %c0_0, %c0_1] : memref<1x4x256xf32, #tpu.memory_space<vmem>>, vector<1x4x256xf32>
    %1 = vector.shape_cast %0 : vector<1x4x256xf32> to vector<4x256xf32>
    %2 = tpu.iota {dimensions = array<i32: 1>} : vector<1x256xi32>
    %c16_i32 = arith.constant 16 : i32
    %c0_i32 = arith.constant 0 : i32
    %3 = arith.cmpi eq, %c16_i32, %c0_i32 : i32
    %c1_i32 = arith.constant 1 : i32
    %4 = arith.select %3, %c1_i32, %c16_i32 : i32
    %5 = vector.broadcast %4 : i32 to vector<1x256xi32>
    %6 = arith.remsi %2, %5 : vector<1x256xi32>
    %c0_i32_2 = arith.constant 0 : i32
    %7 = vector.broadcast %c0_i32_2 : i32 to vector<1x256xi32>
    %8 = arith.cmpi ne, %6, %7 : vector<1x256xi32>
    %c0_i32_3 = arith.constant 0 : i32
    %9 = vector.broadcast %c0_i32_3 : i32 to vector<1x256xi32>
    %10 = arith.cmpi slt, %6, %9 : vector<1x256xi32>
    %c0_i32_4 = arith.constant 0 : i32
    %11 = arith.cmpi slt, %4, %c0_i32_4 : i32
    %12 = vector.broadcast %11 : i1 to vector<1x256xi1>
    %13 = vector.broadcast %12 : vector<1x256xi1> to vector<1x256xi1>
    %14 = arith.xori %10, %13 : vector<1x256xi1>
    %15 = arith.andi %14, %8 : vector<1x256xi1>
    %16 = vector.broadcast %4 : i32 to vector<1x256xi32>
    %17 = arith.addi %6, %16 : vector<1x256xi32>
    %18 = arith.select %15, %17, %6 : vector<1x256xi1>, vector<1x256xi32>
    %c15_i32 = arith.constant 15 : i32
    %19 = vector.broadcast %c15_i32 : i32 to vector<1x256xi32>
    %20 = arith.cmpi eq, %18, %19 : vector<1x256xi32>
    %cst = arith.constant 0.000000e+00 : f32
    %21 = vector.shape_cast %20 : vector<1x256xi1> to vector<1x256xi1>
    %22 = vector.broadcast %21 : vector<1x256xi1> to vector<4x256xi1>
    %23 = vector.broadcast %cst : f32 to vector<4x256xf32>
    %24 = arith.select %22, %23, %1 : vector<4x256xi1>, vector<4x256xf32>
    %c0_i32_5 = arith.constant 0 : i32
    %25 = vector.broadcast %c0_i32_5 : i32 to vector<1x256xi32>
    %26 = arith.cmpi eq, %18, %25 : vector<1x256xi32>
    %cst_6 = arith.constant 0.000000e+00 : f32
    %27 = vector.shape_cast %26 : vector<1x256xi1> to vector<1x256xi1>
    %28 = vector.broadcast %27 : vector<1x256xi1> to vector<4x256xi1>
    %29 = vector.broadcast %cst_6 : f32 to vector<4x256xf32>
    %30 = arith.select %28, %29, %1 : vector<4x256xi1>, vector<4x256xf32>
    %cst_7 = arith.constant 0.000000e+00 : f32
    %31 = vector.broadcast %cst_7 : f32 to vector<4x18xf32>
    %cst_8 = arith.constant 0.000000e+00 : f32
    %32 = vector.broadcast %cst_8 : f32 to vector<4x16xf32>
    %33 = tpu.concatenate %31, %24, %32 in 1 : vector<4x18xf32>, vector<4x256xf32>, vector<4x16xf32> -> vector<4x290xf32>
    %cst_9 = arith.constant 0.000000e+00 : f32
    %34 = vector.broadcast %cst_9 : f32 to vector<4x17xf32>
    %cst_10 = arith.constant 0.000000e+00 : f32
    %35 = vector.broadcast %cst_10 : f32 to vector<4x17xf32>
    %36 = tpu.concatenate %34, %1, %35 in 1 : vector<4x17xf32>, vector<4x256xf32>, vector<4x17xf32> -> vector<4x290xf32>
    %cst_11 = arith.constant 0.000000e+00 : f32
    %37 = vector.broadcast %cst_11 : f32 to vector<4x16xf32>
    %cst_12 = arith.constant 0.000000e+00 : f32
    %38 = vector.broadcast %cst_12 : f32 to vector<4x18xf32>
    %39 = tpu.concatenate %37, %30, %38 in 1 : vector<4x16xf32>, vector<4x256xf32>, vector<4x18xf32> -> vector<4x290xf32>
    %40 = tpu.concatenate %33, %36, %39 in 0 : vector<4x290xf32>, vector<4x290xf32>, vector<4x290xf32> -> vector<12x290xf32>
    %41 = vector.extract_strided_slice %40 {offsets = [0, 1], sizes = [12, 256], strides = [1, 1]} : vector<12x290xf32> to vector<12x256xf32>
    %42 = vector.extract_strided_slice %40 {offsets = [0, 17], sizes = [12, 256], strides = [1, 1]} : vector<12x290xf32> to vector<12x256xf32>
    %43 = vector.extract_strided_slice %40 {offsets = [0, 33], sizes = [12, 256], strides = [1, 1]} : vector<12x290xf32> to vector<12x256xf32>
    %44 = tpu.concatenate %41, %42, %43 in 0 : vector<12x256xf32>, vector<12x256xf32>, vector<12x256xf32> -> vector<36x256xf32>
    %c0_13 = arith.constant 0 : index
    %c0_14 = arith.constant 0 : index
    %45 = vector.load %arg2[%c0_13, %c0_14] : memref<8x36xf32, #tpu.memory_space<vmem>>, vector<8x36xf32>
    %cst_15 = arith.constant dense<0.000000e+00> : vector<8x256xf32>
    %46 = tpu.matmul %45, %44, %cst_15 {dimension_numbers = #tpu.dot_dimension_numbers<[1], [0], [0], [1], [0, 0, 1, 1], [], []>} : vector<8x36xf32>, vector<36x256xf32>, vector<8x256xf32> -> vector<8x256xf32>
    %c0_16 = arith.constant 0 : index
    %c0_17 = arith.constant 0 : index
    %47 = vector.load %arg3[%c0_16, %c0_17] : memref<8x1xf32, #tpu.memory_space<vmem>>, vector<8x1xf32>
    %48 = vector.broadcast %47 : vector<8x1xf32> to vector<8x256xf32>
    %49 = arith.addf %46, %48 : vector<8x256xf32>
    %cst_18 = arith.constant 0.000000e+00 : f32
    %50 = vector.broadcast %cst_18 : f32 to vector<8x256xf32>
    %51 = arith.maximumf %49, %50 : vector<8x256xf32>
    %c0_19 = arith.constant 0 : index
    %c0_20 = arith.constant 0 : index
    %c0_21 = arith.constant 0 : index
    %52 = vector.load %arg4[%c0_19, %c0_20, %c0_21] : memref<1x8x256xf32, #tpu.memory_space<vmem>>, vector<1x8x256xf32>
    %53 = vector.shape_cast %52 : vector<1x8x256xf32> to vector<8x256xf32>
    %54 = vector.shape_cast %51 : vector<8x256xf32> to vector<1x8x256xf32>
    tpu.vector_store %arg4[%c0_19, %c0_20, %c0_21], %54 {strides = array<i32>} : memref<1x8x256xf32, #tpu.memory_space<vmem>>, vector<1x8x256xf32>,
    return
  }
  func.func @transform_0(%arg0: i32) -> (i32, i32, i32) {
    %c0_i32 = arith.constant 0 : i32
    %c0_i32_0 = arith.constant 0 : i32
    %c0_i32_1 = arith.constant 0 : i32
    return %arg0, %c0_i32, %c0_i32_0 : i32, i32, i32
  }
  func.func @transform_1(%arg0: i32) -> (i32, i32) {
    %c0_i32 = arith.constant 0 : i32
    %c0_i32_0 = arith.constant 0 : i32
    %c0_i32_1 = arith.constant 0 : i32
    return %c0_i32, %c0_i32_0 : i32, i32
  }
  func.func @transform_2(%arg0: i32) -> (i32, i32) {
    %c0_i32 = arith.constant 0 : i32
    %c0_i32_0 = arith.constant 0 : i32
    %c0_i32_1 = arith.constant 0 : i32
    return %c0_i32, %c0_i32_0 : i32, i32
  }
  func.func @transform_3(%arg0: i32) -> (i32, i32, i32) {
    %c0_i32 = arith.constant 0 : i32
    %c0_i32_0 = arith.constant 0 : i32
    %c0_i32_1 = arith.constant 0 : i32
    return %arg0, %c0_i32, %c0_i32_0 : i32, i32, i32
  }
}

</mosaic_0001>

<llo_original>
// kernel: tpu_custom_call.1
$region0: #{tpu_custom_call.1}
  #allocation0 [shape = 'u32[]', space=smem, size = 0x4, offset = 0x4, fixed_abs, tag = 'smem constant byte address 0x4 - core index']
  #allocation1 [shape = 'u32[144,128]{1,0:T(1,128)}', space=vmem, size = 0x12000, scoped, tag = 'internal scratch']
  %s0 = inlined_call_operand.hbm [shape: f32[2,4,256], index: 0, kind: input, shape index: {}]
  %s1 = inlined_call_operand.vmem [shape: f32[8,36], index: 1, kind: input, shape index: {}]
  %s2 = inlined_call_operand.vmem [shape: f32[8,1], index: 2, kind: input, shape index: {}]
  %s3 = inlined_call_operand.hbm [shape: f32[2,8,256], index: 3, kind: output, shape index: {}]
  %s4 = sld [smem:[#allocation0]]
  $region49: #{tpu_custom_call.1} parent=0
    _
  %s6 = ssub.s32 1, %s4
  %s7 = scalar_select 0, %s6, %s4
  $region1: #{tpu_custom_call.1} parent=0
    #allocation2 [shape = 'u8[8192]{0}', space=vmem, size = 0x2000, scoped, tag = 'input window, operand 0']
    #allocation3 [shape = 's32[2]{0}', space=sflag, size = 0x8, scoped, tag = 'scoped memory for tpu_custom_call.1']
    #allocation4 [shape = 's32[2]{0}', space=sflag, size = 0x8, scoped, tag = 'scoped memory for tpu_custom_call.1']
    #allocation5 [shape = 'u8[16384]{0}', space=vmem, size = 0x4000, scoped, tag = 'output window, operand 0']
    %8 = vsyncpa [#allocation3], 0
    %s9 = scalar_lea.sflag [#allocation3], 1
    %10 = vsyncpa %s9, 0
    %11 = vsyncpa [#allocation4], 0
    %s12 = scalar_lea.sflag [#allocation4], 1
    %13 = vsyncpa %s12, 0
    loop: start=0, step=1, limit=4
    $region2: #{tpu_custom_call.1} parent=1 // loop_pre_header
      _
    $region3: #{tpu_custom_call.1} parent=1 // loop_header
      %s15 = sphi 0, %s19
      %p16 = scmp.ge.s32.totalorder %s15, 4
      %s25 = sphi 0, %s27
      %s28 = sphi 0, %s25
      %s29 = sphi 0, %s28
      %s45 = sphi 0, %s29
      %s49 = sphi 0, %s49
      %s51 = sphi 0, %s49
      %s52 = sphi 0, %s51
      %s66 = sphi 0, %s52
      %s70 = sphi 0, %s70
      %s72 = sphi 0, %s70
      %s73 = sphi 0, %s72
      %s87 = sphi 0, %s73
      %s93 = sphi 0, %s95
      %s96 = sphi 0, %s93
      %s97 = sphi 0, %s96
      %s113 = sphi 0, %s97
    $region4: #{tpu_custom_call.1} parent=1 // loop_header_branch
      %18 = sbr.rel (%p16) target = $region8
    $region5: #{tpu_custom_call.1} parent=1 // loop_body
      %s20 = ssub.s32 %s15, 1
      %s21 = ssub.s32 %s15, 2
      %s22 = sadd.s32 %s15, 1
      %s23 = ssub.s32 %s15, %s22
      %p24 = scmp.eq.s32.totalorder %s23, 0
      %s26 = sadd.s32 %s25, 1
      %s27 = scalar_select %p24, %s25, %s26
      %p30 = pneg %p24
      %p31 = scmp.eq.s32.totalorder %s15, 1
      %p32 = por %p30, %p31
      %p33 = scmp.ne.s32.totalorder %s25, %s28
      %p34 = scmp.eq.s32.totalorder %s15, 0
      %p35 = por %p33, %p34
      %p36 = scmp.ne.s32.totalorder %s25, %s28
      %p37 = scmp.eq.s32.totalorder %s20, 1
      %p38 = por %p36, %p37
      %p39 = scmp.ne.s32.totalorder %s28, %s29
      %p40 = scmp.eq.s32.totalorder %s20, 0
      %p41 = por %p39, %p40
      %p42 = scmp.ne.s32.totalorder %s28, %s29
      %p43 = scmp.eq.s32.totalorder %s21, 1
      %p44 = por %p42, %p43
      %p46 = scmp.ne.s32.totalorder %s29, %s45
      %p47 = scmp.eq.s32.totalorder %s21, 0
      %p48 = por %p46, %p47
      %s50 = sadd.s32 %s49, 1
      %p53 = scmp.eq.s32.totalorder %s15, 1
      %p54 = scmp.ne.s32.totalorder %s49, %s51
      %p55 = scmp.eq.s32.totalorder %s15, 0
      %p56 = por %p54, %p55
      %p57 = scmp.ne.s32.totalorder %s49, %s51
      %p58 = scmp.eq.s32.totalorder %s20, 1
      %p59 = por %p57, %p58
      %p60 = scmp.ne.s32.totalorder %s51, %s52
      %p61 = scmp.eq.s32.totalorder %s20, 0
      %p62 = por %p60, %p61
      %p63 = scmp.ne.s32.totalorder %s51, %s52
      %p64 = scmp.eq.s32.totalorder %s21, 1
      %p65 = por %p63, %p64
      %p67 = scmp.ne.s32.totalorder %s52, %s66
      %p68 = scmp.eq.s32.totalorder %s21, 0
      %p69 = por %p67, %p68
      %s71 = sadd.s32 %s70, 1
      %p74 = scmp.eq.s32.totalorder %s15, 1
      %p75 = scmp.ne.s32.totalorder %s70, %s72
      %p76 = scmp.eq.s32.totalorder %s15, 0
      %p77 = por %p75, %p76
      %p78 = scmp.ne.s32.totalorder %s70, %s72
      %p79 = scmp.eq.s32.totalorder %s20, 1
      %p80 = por %p78, %p79
      %p81 = scmp.ne.s32.totalorder %s72, %s73
      %p82 = scmp.eq.s32.totalorder %s20, 0
      %p83 = por %p81, %p82
      %p84 = scmp.ne.s32.totalorder %s72, %s73
      %p85 = scmp.eq.s32.totalorder %s21, 1
      %p86 = por %p84, %p85
      %p88 = scmp.ne.s32.totalorder %s73, %s87
      %p89 = scmp.eq.s32.totalorder %s21, 0
      %p90 = por %p88, %p89
      %s91 = ssub.s32 %s15, %s22
      %p92 = scmp.eq.s32.totalorder %s91, 0
      %s94 = sadd.s32 %s93, 1
      %s95 = scalar_select %p92, %s93, %s94
      %p98 = pneg %p92
      %p99 = scmp.eq.s32.totalorder %s15, 1
      %p100 = por %p98, %p99
      %p101 = scmp.ne.s32.totalorder %s93, %s96
      %p102 = scmp.eq.s32.totalorder %s15, 0
      %p103 = por %p101, %p102
      %p104 = scmp.ne.s32.totalorder %s93, %s96
      %p105 = scmp.eq.s32.totalorder %s20, 1
      %p106 = por %p104, %p105
      %p107 = scmp.ne.s32.totalorder %s96, %s97
      %p108 = scmp.eq.s32.totalorder %s20, 0
      %p109 = por %p107, %p108
      %p110 = scmp.ne.s32.totalorder %s96, %s97
      %p111 = scmp.eq.s32.totalorder %s21, 1
      %p112 = por %p110, %p111
      %p114 = scmp.ne.s32.totalorder %s97, %s113
      %p115 = scmp.eq.s32.totalorder %s21, 0
      %p116 = por %p114, %p115
      %p117 = scmp.le.s32.totalorder 1, %s15
      %p118 = scmp.lt.s32.totalorder %s15, 3
      %p119 = pnand %p117, %p118
      %p120 = pneg %p119
      // Predicated region
      $region9: #{tpu_custom_call.1} parent=5 // pred_check
        _
      $region10: #{tpu_custom_call.1} parent=5 // pred_check_branch
        %122 = sbr.rel (%p119) target = $region12
      $region11: #{tpu_custom_call.1} parent=5 // pred_region
        %s123 = ssub.s32 %s15, 1
        // Predicated region
        $region13: #{tpu_custom_call.1} parent=11 // pred_check
          %p124 = pneg %p62
        $region14: #{tpu_custom_call.1} parent=11 // pred_check_branch
          %126 = sbr.rel (%p124) target = $region16
        $region15: #{tpu_custom_call.1} parent=11 // pred_region
          _
        $region16: #{tpu_custom_call.1} parent=11 // pred_fallthru
          _
        // Predicated region
        $region17: #{tpu_custom_call.1} parent=11 // pred_check
          %p127 = pneg %p83
        $region18: #{tpu_custom_call.1} parent=11 // pred_check_branch
          %129 = sbr.rel (%p127) target = $region20
        $region19: #{tpu_custom_call.1} parent=11 // pred_region
          _
        $region20: #{tpu_custom_call.1} parent=11 // pred_fallthru
          _
      $region12: #{tpu_custom_call.1} parent=5 // pred_fallthru
        _
      %p130 = scmp.lt.s32.totalorder %s15, 2
      // Predicated region
      $region21: #{tpu_custom_call.1} parent=5 // pred_check
        %p131 = pneg %p130
      $region22: #{tpu_custom_call.1} parent=5 // pred_check_branch
        %133 = sbr.rel (%p131) target = $region24
      $region23: #{tpu_custom_call.1} parent=5 // pred_region
        // Predicated region
        $region25: #{tpu_custom_call.1} parent=23 // pred_check
          %p134 = pneg %p35
        $region26: #{tpu_custom_call.1} parent=23 // pred_check_branch
          %136 = sbr.rel (%p134) target = $region28
        $region27: #{tpu_custom_call.1} parent=23 // pred_region
          %s137 = sand.u32 %s25, 1
          %s138 = scalar_lea.sflag [#allocation3], %s137
          %s139 = sand.u32 %s25, 1
          %s140 = smul.addr %s139, 8
          %s141 = scalar_lea.vmem [#allocation2], %s140
          %s143 = ssub.s32 128, 128
          %144 = vsyncadd %s138, %s143
          %s145 = smul.addr %s15, 2
          %s146 = smul.addr %s145, 64
          %s147 = scalar_lea.hbm %s0, %s146
          %s149 = sshll.u32 %s141, 4
          %s150 = int_to_ptr.vmem [resolvable:$true] %s149
          %152 = dma.hbm_to_vmem [thread:$0]  %s147, 128, %s150, %s138
        $region28: #{tpu_custom_call.1} parent=23 // pred_fallthru
          _
      $region24: #{tpu_custom_call.1} parent=5 // pred_fallthru
        _
      %p153 = scmp.le.s32.totalorder 1, %s15
      %p154 = scmp.lt.s32.totalorder %s15, 3
      %p155 = pnand %p153, %p154
      %p156 = pneg %p155
      // Predicated region
      $region29: #{tpu_custom_call.1} parent=5 // pred_check
        _
      $region30: #{tpu_custom_call.1} parent=5 // pred_check_branch
        %158 = sbr.rel (%p155) target = $region32
      $region31: #{tpu_custom_call.1} parent=5 // pred_region
        %s159 = ssub.s32 %s15, 1
        %s160 = sand.u32 %s28, 1
        %s161 = scalar_lea.sflag [#allocation3], %s160
        %s162 = sand.u32 %s28, 1
        %s163 = smul.addr %s162, 8
        %s164 = scalar_lea.vmem [#allocation2], %s163
        // Predicated region
        $region33: #{tpu_custom_call.1} parent=31 // pred_check
          %p165 = pneg %p41
        $region34: #{tpu_custom_call.1} parent=31 // pred_check_branch
          %167 = sbr.rel (%p165) target = $region36
        $region35: #{tpu_custom_call.1} parent=31 // pred_region
          %168 = dma.done %s161, 128
        $region36: #{tpu_custom_call.1} parent=31 // pred_fallthru
          _
        %s169 = sand.u32 %s28, 1
        %s170 = scalar_lea.sflag [#allocation3], %s169
        %s171 = sand.u32 %s28, 1
        %s172 = smul.addr %s171, 8
        %s173 = scalar_lea.vmem [#allocation2], %s172
        %p174 = pneg %p41
        %p175 = pneg %p38
        %p176 = pneg %p62
        %p177 = pneg %p59
        %p178 = pneg %p83
        %p179 = pneg %p80
        %p180 = pneg %p109
        %p181 = pneg %p106
        %s182 = sand.u32 %s96, 1
        %s183 = scalar_lea.sflag [#allocation4], %s182
        %s184 = sand.u32 %s96, 1
        %s185 = smul.addr %s184, 16
        %s186 = scalar_lea.vmem [#allocation5], %s185
        %v187 = vld [vmem:[%s164] sm:$0xff]
        %v188 = vlaneseq
        %v189 = vand.u32 %v188, 127
        %v190 = vadd.s32 %v189, 128
        %vm191 = vcmp.lt.s32.totalorder %v189, 0
        %v192 = vsub.s32 0, %v189
        %v193 = vsel %vm191, %v192, %v189
        %v194 = vshrl.u32 %v193, 4
        %v195 = vand.u32 %v193, 15
        %v196 = vsub.s32 0, %v195
        %v197 = vsel %vm191, %v196, %v195
        %vm198 = vcmp.lt.s32.totalorder %v190, 0
        %v199 = vsub.s32 0, %v190
        %v200 = vsel %vm198, %v199, %v190
        %v201 = vshrl.u32 %v200, 4
        %v202 = vand.u32 %v200, 15
        %v203 = vsub.s32 0, %v202
        %v204 = vsel %vm198, %v203, %v202
        %vm205 = vcmp.ne.s32.totalorder %v197, 0
        %vm206 = vcmp.ne.s32.totalorder %v204, 0
        %vm207 = vcmp.lt.s32.totalorder %v197, 0
        %vm208 = vcmp.lt.s32.totalorder %v204, 0
        %vm209 = vmand %vm207, %vm205
        %vm210 = vmand %vm208, %vm206
        %v211 = vadd.s32 %v197, 16
        %v212 = vadd.s32 %v204, 16
        %v213 = vsel %vm209, %v211, %v197
        %v214 = vsel %vm210, %v212, %v204
        %vm215 = vcmp.eq.s32.totalorder %v213, 15
        %vm216 = vcmp.eq.s32.totalorder %v214, 15
        %v217 = vsel %vm215, 1, 0
        %v218 = vsel %vm216, 1, 0
        %vm219 = vcmp.eq.s32.totalorder %v217, 1
        %vm220 = vcmp.eq.s32.totalorder %v218, 1
        %v222 = vcombine.high %v187, %v187
        %v224 = vsel %vm219, 0.0, %v187
        %v225 = vsel %vm220, 0.0, %v222
        %vm226 = vcmp.eq.s32.totalorder %v213, 0
        %vm227 = vcmp.eq.s32.totalorder %v214, 0
        %v228 = vsel %vm226, 1, 0
        %v229 = vsel %vm227, 1, 0
        %vm230 = vcmp.eq.s32.totalorder %v228, 1
        %vm231 = vcmp.eq.s32.totalorder %v229, 1
        %v232 = vsel %vm230, 0.0, %v187
        %v233 = vsel %vm231, 0.0, %v222
        %236 = vrot.lane.b32.xlu0 %v224, 18
        %v237 = vpop.permute.xlu0 %236
        %238 = vrot.lane.b32.xlu0 %v225, 18
        %v239 = vpop.permute.xlu0 %238
        %vm240 = vcmask 146432
        %v241 = vsel %vm240, %v237, %v239
        %v245 = vsel %vm240, 0.0, %v237
        %v246 = vsel %vm240, %v239, 0.0
        %247 = vrot.lane.b32.xlu0 %v187, 17
        %v248 = vpop.permute.xlu0 %247
        %249 = vrot.lane.b32.xlu0 %v222, 17
        %v250 = vpop.permute.xlu0 %249
        %vm251 = vcmask 138240
        %v252 = vsel %vm251, %v248, %v250
        %v255 = vsel %vm251, 0.0, %v248
        %v256 = vsel %vm251, %v250, 0.0
        %259 = vrot.lane.b32.xlu0 %v232, 16
        %v260 = vpop.permute.xlu0 %259
        %261 = vrot.lane.b32.xlu0 %v233, 16
        %v262 = vpop.permute.xlu0 %261
        %vm263 = vcmask 130048
        %v264 = vsel %vm263, %v260, %v262
        %v268 = vsel %vm263, 0.0, %v260
        %v269 = vsel %vm263, %v262, 0.0
        %v272 = vrot.slane %v255, 4
        %v273 = vrot.slane %v252, 4
        %v274 = vrot.slane %v256, 4
        %vm278 = vcmask 1043456
        %v279 = vsel %vm278, %v245, %v272
        %v280 = vsel %vm278, %v241, %v273
        %v281 = vsel %vm278, %v246, %v274
        %v287 = vrot.slane %v279, 4
        %v288 = vrot.slane %v280, 4
        %v289 = vrot.slane %v281, 4
        %v290 = vrot.slane %v268, 4
        %v291 = vsel %vm278, %v287, %v290
        %v292 = vrot.slane %v264, 4
        %v293 = vsel %vm278, %v288, %v292
        %v294 = vrot.slane %v269, 4
        %v295 = vsel %vm278, %v289, %v294
        %296 = vrot.lane.b32.xlu0 %v287, 112
        %v297 = vpop.permute.xlu0 %296
        %298 = vrot.lane.b32.xlu0 %v288, 112
        %v299 = vpop.permute.xlu0 %298
        %300 = vrot.lane.b32.xlu0 %v289, 112
        %v301 = vpop.permute.xlu0 %300
        %302 = vrot.lane.b32.xlu0 %v291, 112
        %v303 = vpop.permute.xlu0 %302
        %304 = vrot.lane.b32.xlu0 %v293, 112
        %v305 = vpop.permute.xlu0 %304
        %306 = vrot.lane.b32.xlu0 %v295, 112
        %v307 = vpop.permute.xlu0 %306
        %vm308 = vcmask 916480
        %v309 = vsel %vm308, %v297, %v299
        %v310 = vsel %vm308, %v299, %v301
        %v311 = vsel %vm308, %v303, %v305
        %v312 = vsel %vm308, %v305, %v307
        %316 = vrot.lane.b32.xlu0 %v279, 96
        %v317 = vpop.permute.xlu0 %316
        %318 = vrot.lane.b32.xlu0 %v280, 96
        %v319 = vpop.permute.xlu0 %318
        %320 = vrot.lane.b32.xlu0 %v281, 96
        %v321 = vpop.permute.xlu0 %320
        %322 = vrot.lane.b32.xlu0 %v268, 96
        %v323 = vpop.permute.xlu0 %322
        %324 = vrot.lane.b32.xlu0 %v264, 96
        %v325 = vpop.permute.xlu0 %324
        %326 = vrot.lane.b32.xlu0 %v269, 96
        %v327 = vpop.permute.xlu0 %326
        %vm328 = vcmask 785408
        %v329 = vsel %vm328, %v317, %v319
        %v330 = vsel %vm328, %v319, %v321
        %v331 = vsel %vm328, %v323, %v325
        %v332 = vsel %vm328, %v325, %v327
        %v333 = vsel %vm278, %v268, %v309
        %v334 = vsel %vm278, %v264, %v310
        %v335 = vsel %vm278, %v269, %v301
        %v336 = vld [vmem:[%s1] sm:$0xff]
        %v337 = vld [vmem:[%s2] sm:$0xff]
        %339 = vset.pattern.permute.xlu0 0
        %340 = vperm.xlu0 %339, %v337
        %v341 = vpop.permute.xlu0 %340
        %346 = vrot.lane.b32.xlu0 %v279, 127
        %v347 = vpop.permute.xlu0 %346
        %348 = vrot.lane.b32.xlu0 %v280, 127
        %v349 = vpop.permute.xlu0 %348
        %350 = vrot.lane.b32.xlu0 %v281, 127
        %v351 = vpop.permute.xlu0 %350
        %352 = vrot.lane.b32.xlu0 %v333, 127
        %v353 = vpop.permute.xlu0 %352
        %354 = vrot.lane.b32.xlu0 %v334, 127
        %v355 = vpop.permute.xlu0 %354
        %356 = vrot.lane.b32.xlu0 %v335, 127
        %v357 = vpop.permute.xlu0 %356
        %358 = vrot.lane.b32.xlu0 %v311, 127
        %v359 = vpop.permute.xlu0 %358
        %360 = vrot.lane.b32.xlu0 %v312, 127
        %v361 = vpop.permute.xlu0 %360
        %362 = vrot.lane.b32.xlu0 %v307, 127
        %v363 = vpop.permute.xlu0 %362
        %364 = vrot.lane.b32.xlu0 %v329, 127
        %v365 = vpop.permute.xlu0 %364
        %366 = vrot.lane.b32.xlu0 %v330, 127
        %v367 = vpop.permute.xlu0 %366
        %368 = vrot.lane.b32.xlu0 %v321, 127
        %v369 = vpop.permute.xlu0 %368
        %370 = vrot.lane.b32.xlu0 %v331, 127
        %v371 = vpop.permute.xlu0 %370
        %372 = vrot.lane.b32.xlu0 %v332, 127
        %v373 = vpop.permute.xlu0 %372
        %374 = vrot.lane.b32.xlu0 %v327, 127
        %v375 = vpop.permute.xlu0 %374
        %vm376 = vcmask 1039360
        %v377 = vsel %vm376, %v347, %v349
        %v378 = vsel %vm376, %v349, %v351
        %v379 = vsel %vm376, %v353, %v355
        %v380 = vsel %vm376, %v355, %v357
        %v381 = vsel %vm376, %v359, %v361
        %v382 = vsel %vm376, %v361, %v363
        %v383 = vsel %vm376, %v365, %v367
        %v384 = vsel %vm376, %v367, %v369
        %v385 = vsel %vm376, %v371, %v373
        %v386 = vsel %vm376, %v373, %v375
        %vm395 = vcmask 293888
        %v397 = vsel %vm395, %v336, 0
        %v399 = vsel %vm278, %v385, 0
        %v401 = vsel %vm278, %v386, 0
        %403 = vmatprep.subr.mxu0 0.0
        %404 = vmatpush1.msra.mxu0 0.0
        %405 = vmatprep.subr.mxu0 0.0
        %406 = vmatpush1.msra.mxu0 0.0
        %407 = vmatprep.subr.mxu0 0.0
        %408 = vmatpush1.msra.mxu0 0.0
        %409 = vmatprep.subr.mxu0 0.0
        %410 = vmatpush1.msra.mxu0 0.0
        %411 = vmatprep.subr.mxu0 0.0
        %412 = vmatpush1.msra.mxu0 0.0
        %413 = vmatprep.subr.mxu0 0.0
        %414 = vmatpush1.msra.mxu0 0.0
        %415 = vmatprep.subr.mxu0 0.0
        %416 = vmatpush1.msra.mxu0 0.0
        %417 = vmatprep.subr.mxu0 0.0
        %418 = vmatpush1.msra.mxu0 0.0
        %419 = vmatprep.subr.mxu0 0.0
        %420 = vmatpush1.msra.mxu0 0.0
        %421 = vmatprep.subr.mxu0 0.0
        %422 = vmatpush1.msra.mxu0 0.0
        %423 = vmatprep.subr.mxu0 0.0
        %424 = vmatpush1.msra.mxu0 0.0
        %425 = vmatprep.subr.mxu0 %v401
        %426 = vmatpush1.msra.mxu0 %v399
        %427 = vmatprep.subr.mxu0 %v384
        %428 = vmatpush1.msra.mxu0 %v383
        %429 = vmatprep.subr.mxu0 %v382
        %430 = vmatpush1.msra.mxu0 %v381
        %431 = vmatprep.subr.mxu0 %v380
        %432 = vmatpush1.msra.mxu0 %v379
        %433 = vmatprep.subr.mxu0 %v378
        %434 = vmatpush1.msra.mxu0 %v377
        %435 = vmatprep.subr.mxu0 0.0
        %436 = vmatpush2.msra.mxu0 0.0
        %437 = vmatprep.subr.mxu0 0.0
        %438 = vmatpush2.msra.mxu0 0.0
        %439 = vmatprep.subr.mxu0 0.0
        %440 = vmatpush2.msra.mxu0 0.0
        %441 = vmatprep.subr.mxu0 0.0
        %442 = vmatpush2.msra.mxu0 0.0
        %443 = vmatprep.subr.mxu0 0.0
        %444 = vmatpush2.msra.mxu0 0.0
        %445 = vmatprep.subr.mxu0 0.0
        %446 = vmatpush2.msra.mxu0 0.0
        %447 = vmatprep.subr.mxu0 0.0
        %448 = vmatpush2.msra.mxu0 0.0
        %449 = vmatprep.subr.mxu0 0.0
        %450 = vmatpush2.msra.mxu0 0.0
        %451 = vmatprep.subr.mxu0 0.0
        %452 = vmatpush2.msra.mxu0 0.0
        %453 = vmatprep.subr.mxu0 0.0
        %454 = vmatpush2.msra.mxu0 0.0
        %455 = vmatprep.subr.mxu0 0.0
        %456 = vmatpush2.msra.mxu0 0.0
        %457 = vmatprep.subr.mxu0 0.0
        %458 = vmatpush2.msra.mxu0 0.0
        %459 = vmatprep.subr.mxu0 0.0
        %460 = vmatpush2.msra.mxu0 0.0
        %461 = vmatprep.subr.mxu0 0.0
        %462 = vmatpush2.msra.mxu0 0.0
        %463 = vmatprep.subr.mxu0 0.0
        %464 = vmatpush2.msra.mxu0 0.0
        %465 = vmatprep.subr.mxu0 0.0
        %466 = vmatpush2.msra.mxu0 0.0
        %467 = vmatprep.mubr.f32.mxu0 0.0
        %468 = vmatmul.mubr.f32.gmra.mxu0 %v397
        %v469 = vpop.f32.mrf.mxu0
        %v470 = vadd.f32 %v341, %v469
        %v471 = vpop.f32.mrf.mxu0
        %v472 = vadd.f32 %v341, %v471
        %473 = vdwg.mxu0
        %v474 = vmax.f32 %v470, 0.0
        %v475 = vmax.f32 %v472, 0.0
        %476 = vst [vmem:[%s186] sm:$0xff] %v474
        %477 = vst [vmem:[%s186 + $0x8] sm:$0xff] %v475
        %s478 = sand.u32 %s96, 1
        %s479 = scalar_lea.sflag [#allocation4], %s478
        %s480 = sand.u32 %s96, 1
        %s481 = smul.addr %s480, 16
        %s482 = scalar_lea.vmem [#allocation5], %s481
        // Predicated region
        $region37: #{tpu_custom_call.1} parent=31 // pred_check
          %p483 = pneg %p106
        $region38: #{tpu_custom_call.1} parent=31 // pred_check_branch
          %485 = sbr.rel (%p483) target = $region40
        $region39: #{tpu_custom_call.1} parent=31 // pred_region
          %s487 = ssub.s32 256, 256
          %488 = vsyncadd %s479, %s487
          %s489 = smul.addr %s20, 2
          %s490 = smul.addr %s489, 128
          %s491 = scalar_lea.hbm %s3, %s490
          %s493 = sshll.u32 %s482, 4
          %s494 = int_to_ptr.vmem [resolvable:$true] %s493
          %496 = dma.vmem_to_hbm [thread:$0]  %s494, 256, %s491, %s479
        $region40: #{tpu_custom_call.1} parent=31 // pred_fallthru
          _
      $region32: #{tpu_custom_call.1} parent=5 // pred_fallthru
        _
      %p497 = scmp.le.s32.totalorder 2, %s15
      // Predicated region
      $region41: #{tpu_custom_call.1} parent=5 // pred_check
        %p498 = pneg %p497
      $region42: #{tpu_custom_call.1} parent=5 // pred_check_branch
        %500 = sbr.rel (%p498) target = $region44
      $region43: #{tpu_custom_call.1} parent=5 // pred_region
        %s501 = ssub.s32 %s15, 2
        // Predicated region
        $region45: #{tpu_custom_call.1} parent=43 // pred_check
          %p502 = pneg %p112
        $region46: #{tpu_custom_call.1} parent=43 // pred_check_branch
          %504 = sbr.rel (%p502) target = $region48
        $region47: #{tpu_custom_call.1} parent=43 // pred_region
          %s505 = sand.u32 %s97, 1
          %s506 = scalar_lea.sflag [#allocation4], %s505
          %s507 = sand.u32 %s97, 1
          %s508 = smul.addr %s507, 16
          %s509 = scalar_lea.vmem [#allocation5], %s508
          %510 = dma.done %s506, 256
        $region48: #{tpu_custom_call.1} parent=43 // pred_fallthru
          _
      $region44: #{tpu_custom_call.1} parent=5 // pred_fallthru
        _
    $region6: #{tpu_custom_call.1} parent=1 // loop_footer
      %s19 = sadd.s32 1, %s15
    $region7: #{tpu_custom_call.1} parent=1 // loop_footer_branch
      %14 = sbr.rel target = $region3
    $region8: #{tpu_custom_call.1} parent=1 // loop_exit
      _
    %511 = vsyncpa [#allocation3], 1
    %s512 = scalar_lea.sflag [#allocation3], 1
    %513 = vsyncpa %s512, 1
    %514 = vsyncpa [#allocation4], 1
    %s515 = scalar_lea.sflag [#allocation4], 1
    %516 = vsyncpa %s515, 1

</llo_original>
